<compile_context>
chip_gen: v6e
topology: v6e:2x2x1
jax: 0.10.0
libtpu: 0.0.40
codegen_flags: <defaults>
</compile_context>

<pallas_src>
import jax
import jax.numpy as jnp
from jax.experimental import pallas as pl
from jax.experimental.pallas import tpu as pltpu


def _round_up(x: int, m: int) -> int:
    return ((x + m - 1) // m) * m


def _vmem_capacity_bytes() -> int:
    """Physical per-core VMEM bytes; conservative (v7x, 64 MiB) fallback."""
    try:
        cap = int(pltpu.get_tpu_info().vmem_capacity_bytes)
        if cap > 0:
            return cap
    except Exception:
        pass
    return 64 * 1024 * 1024


def _make_ce_kernel(label_smoothing: float, num_rows: int, num_classes: int,
                    block_rows: int):
    eps = float(label_smoothing)
    inv_c = 1.0 / float(num_classes)
    on_w = (1.0 - eps) + eps * inv_c      # weight of the target class
    off_w = eps * inv_c                   # weight of every other class

    def ce_kernel(logits_ref, target_ref, out_ref):
        # logits_ref: (block_rows, C) native dtype, VMEM
        # target_ref: (block_rows, 1) int32, VMEM
        # out_ref:    (1, 8, 128) f32 partial-sum block for THIS grid step
        i = pl.program_id(0)

        x = logits_ref[...].astype(jnp.float32)            # (R, C) f32
        t = target_ref[...]                                 # (R, 1) int32
        r, c = x.shape

        ones_c = jnp.ones((c, 1), dtype=jnp.float32)

        # numerically stable LSE: max on XLU, exp on EUP, lane-sum on MXU
        m = jnp.max(x, axis=-1, keepdims=True)              # (R, 1)
        ex = jnp.exp(x - m)                                  # (R, C)
        sum_ex = jnp.dot(ex, ones_c,
                         precision=jax.lax.Precision.HIGHEST,
                         preferred_element_type=jnp.float32)  # (R, 1)
        lse = m + jnp.log(sum_ex)                             # (R, 1)

        # label-smoothed target term as ONE weighted lane reduction on the
        # un-shifted logits (the max shift cancels exactly in the loss):
        #   loss = lse - (1-eps)*x[t] - (eps/C)*sum_c(x) = lse - sum_c(w_c*x_c)
        class_ids = jax.lax.broadcasted_iota(jnp.int32, (r, c), 1)
        w = jnp.where(class_ids == t, on_w, off_w)            # (R, C)
        wsum = jnp.dot(w * x, ones_c,
                       precision=jax.lax.Precision.HIGHEST,
                       preferred_element_type=jnp.float32)     # (R, 1)

        per_row = lse - wsum                                   # (R, 1)

        # mask rows beyond the true N (ragged last block)
        row_ids = i * block_rows + jax.lax.broadcasted_iota(jnp.int32, (r, 1), 0)
        per_row = jnp.where(row_ids < num_rows, per_row, 0.0)

        # one partial sum per grid step; no cross-step state -> megacore safe
        block_sum = jnp.sum(per_row)
        out_ref[...] = jnp.full((1, 8, 128), block_sum, dtype=jnp.float32)

    return ce_kernel


def cross_entropy_loss_extra_batch(logits, target, label_smoothing: float = 0.1,
                                   *, max_block_rows: int = 8192,
                                   min_pallas_bytes: int = 64 * 1024,
                                   force_pallas: bool = False):
    """logits: (b, s, c); target: (b, s) int -> scalar f32 mean CE loss."""
    b, s, c = logits.shape
    n = b * s
    eps = float(label_smoothing)
    logits_flat = logits.reshape(n, c)                       # native dtype on the wire
    target_flat = target.reshape(n, 1).astype(jnp.int32)

    itemsize = jnp.dtype(logits.dtype).itemsize

    # tiny-problem fast path: fixed pallas_call launch/pipeline overhead would
    # dwarf the actual work for a few-KiB problem.
    if not force_pallas and n * c * itemsize < min_pallas_bytes:
        x = logits_flat.astype(jnp.float32)
        logp = jax.nn.log_softmax(x, axis=-1)
        nll = -jnp.take_along_axis(logp, target_flat, axis=-1)[:, 0]
        smooth = -jnp.mean(logp, axis=-1)
        return jnp.mean((1.0 - eps) * nll + eps * smooth)

    # ---- generation-aware block sizing ------------------------------------
    physical = _vmem_capacity_bytes()                        # 64 MiB v7x, 128 MiB v5e/v6e
    vmem_limit = int(min(physical * 3 // 4, 96 * 1024 * 1024))  # 48 MiB v7x, 96 MiB v5e/v6e
    block_budget = vmem_limit // 2                           # headroom for compiler scratch

    c_pad = _round_up(c, 128)                                # VMEM lane padding
    per_row_bytes = (2 * c_pad * itemsize                    # double-buffered logits tile
                     + 2 * 128 * 4                           # double-buffered target tile (lane-padded)
                     + 6 * c_pad * 4)                        # in-kernel f32 temporaries
    cap_rows = max(8, block_budget // per_row_bytes)
    block_rows = int(min(max_block_rows, cap_rows, _round_up(n, 8)))
    block_rows = max(8, (block_rows // 8) * 8)

    grid_n = pl.cdiv(n, block_rows)

    partial = pl.pallas_call(
        _make_ce_kernel(eps, n, c, block_rows),
        grid=(grid_n,),
        out_shape=jax.ShapeDtypeStruct((grid_n, 8, 128), jnp.float32),
        in_specs=[
            pl.BlockSpec((block_rows, c), lambda i: (i, 0)),   # logits row block
            pl.BlockSpec((block_rows, 1), lambda i: (i, 0)),   # target row block
        ],
        out_specs=pl.BlockSpec((1, 8, 128), lambda i: (i, 0, 0)),
        compiler_params=pltpu.CompilerParams(
            dimension_semantics=("parallel",),   # independent blocks -> megacore OK
            vmem_limit_bytes=vmem_limit,
        ),
    )(logits_flat, target_flat)

    # final reduction of the per-block partial sums + mean normalization
    return jnp.sum(partial[:, 0, 0]) * jnp.float32(1.0 / n)


def _reference(logits, target, label_smoothing):
    # pure-JAX reference (matches PyTorch label-smoothed CE, mean reduction)
    b, s, c = logits.shape
    x = logits.reshape(b * s, c).astype(jnp.float32)
    t = target.reshape(b * s)
    logp = jax.nn.log_softmax(x, axis=-1)
    nll = -jnp.take_along_axis(logp, t[:, None], axis=-1)[:, 0]
    smooth = -jnp.mean(logp, axis=-1)
    per_row = (1.0 - label_smoothing) * nll + label_smoothing * smooth
    return jnp.mean(per_row)


if __name__ == "__main__":
    key = jax.random.PRNGKey(0)
    k1, k2, k3, k4 = jax.random.split(key, 4)
    eps = 0.1

    # Small shape implied by the module: batch=2, num_samples=8, num_classes=32.
    # force_pallas=True so the Pallas kernel itself is exercised at this size.
    b, s, c = 2, 8, 32
    logits = jax.random.normal(k1, (b, s, c), dtype=jnp.float32)
    target = jax.random.randint(k2, (b, s), 0, c, dtype=jnp.int32)

    loss = jax.block_until_ready(
        cross_entropy_loss_extra_batch(logits, target, eps, force_pallas=True))
    ref = _reference(logits, target, eps)
    assert jnp.allclose(loss, ref, rtol=1e-4, atol=1e-4), (loss, ref)

    # Larger case: exercises the row grid / boundary masking and the native
    # bf16 (halved HBM traffic) input path through the Pallas kernel.
    b2, s2, c2 = 4, 300, 48
    logits2 = jax.random.normal(k3, (b2, s2, c2), dtype=jnp.bfloat16)
    target2 = jax.random.randint(k4, (b2, s2), 0, c2, dtype=jnp.int32)

    loss2 = jax.block_until_ready(
        cross_entropy_loss_extra_batch(logits2, target2, eps))
    ref2 = _reference(logits2, target2, eps)
    assert jnp.allclose(loss2, ref2, rtol=1e-3, atol=1e-3), (loss2, ref2)

    print("KERNEL_OK")
</pallas_src>

<mosaic_0001>
module attributes {stable_mosaic.version = 11 : i64} {
  func.func @ce_kernel(%arg0: i32, %arg1: memref<16x32xf32, #tpu.memory_space<vmem>>, %arg2: memref<16x1xi32, #tpu.memory_space<vmem>>, %arg3: memref<1x8x128xf32, #tpu.memory_space<vmem>>) attributes {dimension_semantics = [#tpu.dimension_semantics<parallel>], iteration_bounds = array<i64: 1>, scalar_prefetch = 0 : i64, scratch_operands = 0 : i64, tpu.core_type = #tpu.core_type<tc>, window_params = [{transform_indices = @transform_0, window_bounds = array<i64: 16, 32>}, {transform_indices = @transform_1, window_bounds = array<i64: 16, 1>}, {transform_indices = @transform_2, window_bounds = array<i64: 1, 8, 128>}]} {
    %c0 = arith.constant 0 : index
    %c0_0 = arith.constant 0 : index
    %0 = vector.load %arg1[%c0, %c0_0] : memref<16x32xf32, #tpu.memory_space<vmem>>, vector<16x32xf32>
    %c0_1 = arith.constant 0 : index
    %c0_2 = arith.constant 0 : index
    %1 = vector.load %arg2[%c0_1, %c0_2] : memref<16x1xi32, #tpu.memory_space<vmem>>, vector<16x1xi32>
    %cst = arith.constant 1.000000e+00 : f32
    %2 = vector.broadcast %cst : f32 to vector<32x1xf32>
    %cst_3 = arith.constant dense<0xFF800000> : vector<16xf32>
    %3 = vector.multi_reduction <maximumf>, %0, %cst_3 [1] : vector<16x32xf32> to vector<16xf32>
    %4 = vector.shape_cast %3 : vector<16xf32> to vector<16x1xf32>
    %5 = vector.broadcast %4 : vector<16x1xf32> to vector<16x32xf32>
    %6 = arith.subf %0, %5 : vector<16x32xf32>
    %7 = math.exp %6 : vector<16x32xf32>
    %cst_4 = arith.constant dense<0.000000e+00> : vector<16x1xf32>
    %8 = tpu.matmul %7, %2, %cst_4 {dimension_numbers = #tpu.dot_dimension_numbers<[1], [0], [0], [1], [0, 0, 1, 1], [], []>, precision = #tpu.contract_precision<fp32>} : vector<16x32xf32>, vector<32x1xf32>, vector<16x1xf32> -> vector<16x1xf32>
    %9 = math.log %8 : vector<16x1xf32>
    %10 = arith.addf %4, %9 : vector<16x1xf32>
    %11 = tpu.iota {dimensions = array<i32: 1>} : vector<16x32xi32>
    %12 = vector.broadcast %1 : vector<16x1xi32> to vector<16x32xi32>
    %13 = arith.cmpi eq, %11, %12 : vector<16x32xi32>
    %cst_5 = arith.constant 0.903124988 : f32
    %cst_6 = arith.constant 3.125000e-03 : f32
    %14 = vector.broadcast %cst_5 : f32 to vector<16x32xf32>
    %15 = vector.broadcast %cst_6 : f32 to vector<16x32xf32>
    %16 = arith.select %13, %14, %15 : vector<16x32xi1>, vector<16x32xf32>
    %17 = arith.mulf %16, %0 : vector<16x32xf32>
    %cst_7 = arith.constant dense<0.000000e+00> : vector<16x1xf32>
    %18 = tpu.matmul %17, %2, %cst_7 {dimension_numbers = #tpu.dot_dimension_numbers<[1], [0], [0], [1], [0, 0, 1, 1], [], []>, precision = #tpu.contract_precision<fp32>} : vector<16x32xf32>, vector<32x1xf32>, vector<16x1xf32> -> vector<16x1xf32>
    %19 = arith.subf %10, %18 : vector<16x1xf32>
    %c16_i32 = arith.constant 16 : i32
    %20 = arith.muli %arg0, %c16_i32 : i32
    %21 = tpu.iota {dimensions = array<i32: 0>} : vector<16x1xi32>
    %22 = vector.broadcast %20 : i32 to vector<16x1xi32>
    %23 = arith.addi %22, %21 : vector<16x1xi32>
    %c16_i32_8 = arith.constant 16 : i32
    %24 = vector.broadcast %c16_i32_8 : i32 to vector<16x1xi32>
    %25 = arith.cmpi slt, %23, %24 : vector<16x1xi32>
    %cst_9 = arith.constant 0.000000e+00 : f32
    %26 = vector.broadcast %cst_9 : f32 to vector<16x1xf32>
    %27 = arith.select %25, %19, %26 : vector<16x1xi1>, vector<16x1xf32>
    %28 = vector.shape_cast %27 : vector<16x1xf32> to vector<1x16x1xf32>
    %cst_10 = arith.constant dense<0.000000e+00> : vector<1xf32>
    %29 = vector.multi_reduction <add>, %28, %cst_10 [1, 2] : vector<1x16x1xf32> to vector<1xf32>
    %30 = vector.shape_cast %29 : vector<1xf32> to vector<1x1x1xf32>
    %31 = vector.extract %30[0, 0, 0] : f32 from vector<1x1x1xf32>
    %32 = vector.broadcast %31 : f32 to vector<1x8x128xf32>
    %c0_11 = arith.constant 0 : index
    %c0_12 = arith.constant 0 : index
    %c0_13 = arith.constant 0 : index
    %33 = vector.load %arg3[%c0_11, %c0_12, %c0_13] : memref<1x8x128xf32, #tpu.memory_space<vmem>>, vector<1x8x128xf32>
    tpu.vector_store %arg3[%c0_11, %c0_12, %c0_13], %32 {strides = array<i32>} : memref<1x8x128xf32, #tpu.memory_space<vmem>>, vector<1x8x128xf32>,
    return
  }
  func.func @transform_0(%arg0: i32) -> (i32, i32) {
    %c0_i32 = arith.constant 0 : i32
    %c0_i32_0 = arith.constant 0 : i32
    return %arg0, %c0_i32 : i32, i32
  }
  func.func @transform_1(%arg0: i32) -> (i32, i32) {
    %c0_i32 = arith.constant 0 : i32
    %c0_i32_0 = arith.constant 0 : i32
    return %arg0, %c0_i32 : i32, i32
  }
  func.func @transform_2(%arg0: i32) -> (i32, i32, i32) {
    %c0_i32 = arith.constant 0 : i32
    %c0_i32_0 = arith.constant 0 : i32
    %c0_i32_1 = arith.constant 0 : i32
    return %arg0, %c0_i32, %c0_i32_0 : i32, i32, i32
  }
}

</mosaic_0001>

<llo_original>
// kernel: tpu_custom_call.1
$region0: #{tpu_custom_call.1}
  #allocation0 [shape = 'u32[]', space=smem, size = 0x4, offset = 0x4, fixed_abs, tag = 'smem constant byte address 0x4 - core index']
  #allocation1 [shape = 'u32[144,128]{1,0:T(1,128)}', space=vmem, size = 0x12000, scoped, tag = 'internal scratch']
  %s0 = inlined_call_operand.vmem [shape: f32[16,32], index: 0, kind: input, shape index: {}]
  %s1 = inlined_call_operand.vmem [shape: s32[16,1], index: 1, kind: input, shape index: {}]
  %s2 = inlined_call_operand.hbm [shape: f32[1,8,128], index: 2, kind: output, shape index: {}]
  %s3 = sld [smem:[#allocation0]]
  $region18: #{tpu_custom_call.1} parent=0
    _
  %s5 = ssub.s32 1, %s3
  %s6 = scalar_select 0, %s5, %s3
  $region1: #{tpu_custom_call.1} parent=0
    #allocation2 [shape = 'u8[4096]{0}', space=vmem, size = 0x1000, scoped, tag = 'output window, operand 0, single buffered']
    #allocation3 [shape = 's32[1]{0}', space=sflag, size = 0x4, scoped, tag = 'scoped memory for tpu_custom_call.1']
    %7 = vsyncpa [#allocation3], 0
    // Predicated region
    $region2: #{tpu_custom_call.1} parent=1 // pred_check
      _
    $region3: #{tpu_custom_call.1} parent=1 // pred_check_branch
      %9 = sbr.rel (0) target = $region5
    $region4: #{tpu_custom_call.1} parent=1 // pred_region
      _
    $region5: #{tpu_custom_call.1} parent=1 // pred_fallthru
      _
    // Predicated region
    $region6: #{tpu_custom_call.1} parent=1 // pred_check
      _
    $region7: #{tpu_custom_call.1} parent=1 // pred_check_branch
      %11 = sbr.rel (0) target = $region9
    $region8: #{tpu_custom_call.1} parent=1 // pred_region
      _
    $region9: #{tpu_custom_call.1} parent=1 // pred_fallthru
      _
    %v12 = vld [vmem:[%s0] sm:$0xff]
    %v13 = vld [vmem:[%s0 + $0x8] sm:$0xff]
    %v14 = vld [vmem:[%s1] sm:$0xff]
    %v15 = vld [vmem:[%s1 + $0x8] sm:$0xff]
    %vm16 = vcmask 261120
    %v17 = vsel %vm16, %v12, -inf
    %18 = vmax.xlane.f32.xlu0 %v17
    %v19 = vpop.xlane.xlu0 %18
    %v20 = vsel %vm16, %v13, -inf
    %21 = vmax.xlane.f32.xlu0 %v20
    %v22 = vpop.xlane.xlu0 %21
    %v23 = vsub.f32 %v12, %v19
    %v24 = vsub.f32 %v13, %v22
    %v25 = vmul.f32 %v23, 1.442695
    %v26 = vpow.pop %v25
    %v27 = vmul.f32 %v24, 1.442695
    %v28 = vpow.pop %v27
    %v30 = vsel %vm16, %v26, 0
    %v33 = vsel %vm16, %v28, 0
    %35 = vmatprep.subr.mxu0 0.0
    %36 = vmatpush1.msra.mxu0 0.0
    %37 = vmatprep.subr.mxu0 0.0
    %38 = vmatpush1.msra.mxu0 0.0
    %39 = vmatprep.subr.mxu0 0.0
    %40 = vmatpush1.msra.mxu0 0.0
    %41 = vmatprep.subr.mxu0 0.0
    %42 = vmatpush1.msra.mxu0 0.0
    %43 = vmatprep.subr.mxu0 0.0
    %44 = vmatpush1.msra.mxu0 0.0
    %45 = vmatprep.subr.mxu0 0.0
    %46 = vmatpush1.msra.mxu0 0.0
    %47 = vmatprep.subr.mxu0 0.0
    %48 = vmatpush1.msra.mxu0 0.0
    %49 = vmatprep.subr.mxu0 0.0
    %50 = vmatpush1.msra.mxu0 0.0
    %51 = vmatprep.subr.mxu0 0.0
    %52 = vmatpush1.msra.mxu0 0.0
    %53 = vmatprep.subr.mxu0 0.0
    %54 = vmatpush1.msra.mxu0 0.0
    %55 = vmatprep.subr.mxu0 0.0
    %56 = vmatpush1.msra.mxu0 0.0
    %57 = vmatprep.subr.mxu0 0.0
    %58 = vmatpush1.msra.mxu0 0.0
    %59 = vmatprep.subr.mxu0 0.0
    %60 = vmatpush1.msra.mxu0 1.0
    %61 = vmatprep.subr.mxu0 0.0
    %62 = vmatpush1.msra.mxu0 1.0
    %63 = vmatprep.subr.mxu0 0.0
    %64 = vmatpush1.msra.mxu0 1.0
    %65 = vmatprep.subr.mxu0 0.0
    %66 = vmatpush1.msra.mxu0 1.0
    %67 = vmatprep.subr.mxu0 0.0
    %68 = vmatpush2.msra.mxu0 0.0
    %69 = vmatprep.subr.mxu0 0.0
    %70 = vmatpush2.msra.mxu0 0.0
    %71 = vmatprep.subr.mxu0 0.0
    %72 = vmatpush2.msra.mxu0 0.0
    %73 = vmatprep.subr.mxu0 0.0
    %74 = vmatpush2.msra.mxu0 0.0
    %75 = vmatprep.subr.mxu0 0.0
    %76 = vmatpush2.msra.mxu0 0.0
    %77 = vmatprep.subr.mxu0 0.0
    %78 = vmatpush2.msra.mxu0 0.0
    %79 = vmatprep.subr.mxu0 0.0
    %80 = vmatpush2.msra.mxu0 0.0
    %81 = vmatprep.subr.mxu0 0.0
    %82 = vmatpush2.msra.mxu0 0.0
    %83 = vmatprep.subr.mxu0 0.0
    %84 = vmatpush2.msra.mxu0 0.0
    %85 = vmatprep.subr.mxu0 0.0
    %86 = vmatpush2.msra.mxu0 0.0
    %87 = vmatprep.subr.mxu0 0.0
    %88 = vmatpush2.msra.mxu0 0.0
    %89 = vmatprep.subr.mxu0 0.0
    %90 = vmatpush2.msra.mxu0 0.0
    %91 = vmatprep.subr.mxu0 0.0
    %92 = vmatpush2.msra.mxu0 0.0
    %93 = vmatprep.subr.mxu0 0.0
    %94 = vmatpush2.msra.mxu0 0.0
    %95 = vmatprep.subr.mxu0 0.0
    %96 = vmatpush2.msra.mxu0 0.0
    %97 = vmatprep.subr.mxu0 0.0
    %98 = vmatpush2.msra.mxu0 0.0
    %99 = vmatprep.mubr.f32.mxu0 0.0
    %v100 = vand.u32 %v30, 4294901760
    %v101 = vsub.f32 %v30, %v100
    %v102 = vand.u32 %v101, 4294901760
    %v103 = vsub.f32 %v101, %v102
    %v104 = vand.u32 %v103, 4294901760
    %105 = vmatmul.mubr.f32.gmra.mxu0 %v104
    %v106 = vpop.f32.mrf.mxu0
    %v107 = vadd.f32 0.0, %v106
    %v108 = vpop.f32.mrf.mxu0
    %109 = vmatprep.mubr.f32.mxu0 0.0
    %v110 = vand.u32 %v33, 4294901760
    %v111 = vsub.f32 %v33, %v110
    %v112 = vand.u32 %v111, 4294901760
    %v113 = vsub.f32 %v111, %v112
    %v114 = vand.u32 %v113, 4294901760
    %115 = vmatmul.mubr.f32.gmra.mxu0 %v114
    %v116 = vpop.f32.mrf.mxu0
    %v117 = vadd.f32 0.0, %v116
    %v118 = vpop.f32.mrf.mxu0
    %119 = vdwg.mxu0
    %120 = vmatprep.subr.mxu0 0.0
    %121 = vmatpush1.msra.mxu0 0.0
    %122 = vmatprep.subr.mxu0 0.0
    %123 = vmatpush1.msra.mxu0 0.0
    %124 = vmatprep.subr.mxu0 0.0
    %125 = vmatpush1.msra.mxu0 0.0
    %126 = vmatprep.subr.mxu0 0.0
    %127 = vmatpush1.msra.mxu0 0.0
    %128 = vmatprep.subr.mxu0 0.0
    %129 = vmatpush1.msra.mxu0 0.0
    %130 = vmatprep.subr.mxu0 0.0
    %131 = vmatpush1.msra.mxu0 0.0
    %132 = vmatprep.subr.mxu0 0.0
    %133 = vmatpush1.msra.mxu0 0.0
    %134 = vmatprep.subr.mxu0 0.0
    %135 = vmatpush1.msra.mxu0 0.0
    %136 = vmatprep.subr.mxu0 0.0
    %137 = vmatpush1.msra.mxu0 0.0
    %138 = vmatprep.subr.mxu0 0.0
    %139 = vmatpush1.msra.mxu0 0.0
    %140 = vmatprep.subr.mxu0 0.0
    %141 = vmatpush1.msra.mxu0 0.0
    %142 = vmatprep.subr.mxu0 0.0
    %143 = vmatpush1.msra.mxu0 0.0
    %144 = vmatprep.subr.mxu0 0.0
    %145 = vmatpush1.msra.mxu0 0.0
    %146 = vmatprep.subr.mxu0 0.0
    %147 = vmatpush1.msra.mxu0 0.0
    %148 = vmatprep.subr.mxu0 0.0
    %149 = vmatpush1.msra.mxu0 0.0
    %150 = vmatprep.subr.mxu0 0.0
    %151 = vmatpush1.msra.mxu0 0.0
    %152 = vmatprep.subr.mxu0 0.0
    %153 = vmatpush2.msra.mxu0 0.0
    %154 = vmatprep.subr.mxu0 0.0
    %155 = vmatpush2.msra.mxu0 0.0
    %156 = vmatprep.subr.mxu0 0.0
    %157 = vmatpush2.msra.mxu0 0.0
    %158 = vmatprep.subr.mxu0 0.0
    %159 = vmatpush2.msra.mxu0 0.0
    %160 = vmatprep.subr.mxu0 0.0
    %161 = vmatpush2.msra.mxu0 0.0
    %162 = vmatprep.subr.mxu0 0.0
    %163 = vmatpush2.msra.mxu0 0.0
    %164 = vmatprep.subr.mxu0 0.0
    %165 = vmatpush2.msra.mxu0 0.0
    %166 = vmatprep.subr.mxu0 0.0
    %167 = vmatpush2.msra.mxu0 0.0
    %168 = vmatprep.subr.mxu0 0.0
    %169 = vmatpush2.msra.mxu0 0.0
    %170 = vmatprep.subr.mxu0 0.0
    %171 = vmatpush2.msra.mxu0 0.0
    %172 = vmatprep.subr.mxu0 0.0
    %173 = vmatpush2.msra.mxu0 0.0
    %174 = vmatprep.subr.mxu0 0.0
    %175 = vmatpush2.msra.mxu0 0.0
    %176 = vmatprep.subr.mxu0 0.0
    %177 = vmatpush2.msra.mxu0 0.0
    %178 = vmatprep.subr.mxu0 0.0
    %179 = vmatpush2.msra.mxu0 0.0
    %180 = vmatprep.subr.mxu0 0.0
    %181 = vmatpush2.msra.mxu0 0.0
    %182 = vmatprep.subr.mxu0 0.0
    %183 = vmatpush2.msra.mxu0 0.0
    %184 = vmatprep.mubr.f32.mxu0 0.0
    %v185 = vand.u32 %v30, 4294901760
    %186 = vmatmul.mubr.f32.gmra.mxu0 %v185
    %v187 = vpop.f32.mrf.mxu0
    %v188 = vadd.f32 %v107, %v187
    %v189 = vpop.f32.mrf.mxu0
    %190 = vmatprep.mubr.f32.mxu0 0.0
    %v191 = vand.u32 %v33, 4294901760
    %192 = vmatmul.mubr.f32.gmra.mxu0 %v191
    %v193 = vpop.f32.mrf.mxu0
    %v194 = vadd.f32 %v117, %v193
    %v195 = vpop.f32.mrf.mxu0
    %196 = vdwg.mxu0
    %197 = vmatprep.subr.mxu0 0.0
    %198 = vmatpush1.msra.mxu0 0.0
    %199 = vmatprep.subr.mxu0 0.0
    %200 = vmatpush1.msra.mxu0 0.0
    %201 = vmatprep.subr.mxu0 0.0
    %202 = vmatpush1.msra.mxu0 0.0
    %203 = vmatprep.subr.mxu0 0.0
    %204 = vmatpush1.msra.mxu0 0.0
    %205 = vmatprep.subr.mxu0 0.0
    %206 = vmatpush1.msra.mxu0 0.0
    %207 = vmatprep.subr.mxu0 0.0
    %208 = vmatpush1.msra.mxu0 0.0
    %209 = vmatprep.subr.mxu0 0.0
    %210 = vmatpush1.msra.mxu0 0.0
    %211 = vmatprep.subr.mxu0 0.0
    %212 = vmatpush1.msra.mxu0 0.0
    %213 = vmatprep.subr.mxu0 0.0
    %214 = vmatpush1.msra.mxu0 0.0
    %215 = vmatprep.subr.mxu0 0.0
    %216 = vmatpush1.msra.mxu0 0.0
    %217 = vmatprep.subr.mxu0 0.0
    %218 = vmatpush1.msra.mxu0 0.0
    %219 = vmatprep.subr.mxu0 0.0
    %220 = vmatpush1.msra.mxu0 0.0
    %221 = vmatprep.subr.mxu0 0.0
    %222 = vmatpush1.msra.mxu0 0.0
    %223 = vmatprep.subr.mxu0 0.0
    %224 = vmatpush1.msra.mxu0 0.0
    %225 = vmatprep.subr.mxu0 0.0
    %226 = vmatpush1.msra.mxu0 0.0
    %227 = vmatprep.subr.mxu0 0.0
    %228 = vmatpush1.msra.mxu0 0.0
    %229 = vmatprep.subr.mxu0 0.0
    %230 = vmatpush2.msra.mxu0 0.0
    %231 = vmatprep.subr.mxu0 0.0
    %232 = vmatpush2.msra.mxu0 0.0
    %233 = vmatprep.subr.mxu0 0.0
    %234 = vmatpush2.msra.mxu0 0.0
    %235 = vmatprep.subr.mxu0 0.0
    %236 = vmatpush2.msra.mxu0 0.0
    %237 = vmatprep.subr.mxu0 0.0
    %238 = vmatpush2.msra.mxu0 0.0
    %239 = vmatprep.subr.mxu0 0.0
    %240 = vmatpush2.msra.mxu0 0.0
    %241 = vmatprep.subr.mxu0 0.0
    %242 = vmatpush2.msra.mxu0 0.0
    %243 = vmatprep.subr.mxu0 0.0
    %244 = vmatpush2.msra.mxu0 0.0
    %245 = vmatprep.subr.mxu0 0.0
    %246 = vmatpush2.msra.mxu0 0.0
    %247 = vmatprep.subr.mxu0 0.0
    %248 = vmatpush2.msra.mxu0 0.0
    %249 = vmatprep.subr.mxu0 0.0
    %250 = vmatpush2.msra.mxu0 0.0
    %251 = vmatprep.subr.mxu0 0.0
    %252 = vmatpush2.msra.mxu0 0.0
    %253 = vmatprep.subr.mxu0 0.0
    %254 = vmatpush2.msra.mxu0 0.0
    %255 = vmatprep.subr.mxu0 0.0
    %256 = vmatpush2.msra.mxu0 0.0
    %257 = vmatprep.subr.mxu0 0.0
    %258 = vmatpush2.msra.mxu0 0.0
    %259 = vmatprep.subr.mxu0 0.0
    %260 = vmatpush2.msra.mxu0 0.0
    %261 = vmatprep.mubr.f32.mxu0 0.0
    %v262 = vand.u32 %v30, 4294901760
    %v263 = vsub.f32 %v30, %v262
    %264 = vmatmul.mubr.f32.gmra.mxu0 %v263
    %v265 = vpop.f32.mrf.mxu0
    %v266 = vadd.f32 %v188, %v265
    %v267 = vpop.f32.mrf.mxu0
    %268 = vmatprep.mubr.f32.mxu0 0.0
    %v269 = vand.u32 %v33, 4294901760
    %v270 = vsub.f32 %v33, %v269
    %271 = vmatmul.mubr.f32.gmra.mxu0 %v270
    %v272 = vpop.f32.mrf.mxu0
    %v273 = vadd.f32 %v194, %v272
    %v274 = vpop.f32.mrf.mxu0
    %275 = vdwg.mxu0
    %276 = vmatprep.subr.mxu0 0.0
    %277 = vmatpush1.msra.mxu0 0.0
    %278 = vmatprep.subr.mxu0 0.0
    %279 = vmatpush1.msra.mxu0 0.0
    %280 = vmatprep.subr.mxu0 0.0
    %281 = vmatpush1.msra.mxu0 0.0
    %282 = vmatprep.subr.mxu0 0.0
    %283 = vmatpush1.msra.mxu0 0.0
    %284 = vmatprep.subr.mxu0 0.0
    %285 = vmatpush1.msra.mxu0 0.0
    %286 = vmatprep.subr.mxu0 0.0
    %287 = vmatpush1.msra.mxu0 0.0
    %288 = vmatprep.subr.mxu0 0.0
    %289 = vmatpush1.msra.mxu0 0.0
    %290 = vmatprep.subr.mxu0 0.0
    %291 = vmatpush1.msra.mxu0 0.0
    %292 = vmatprep.subr.mxu0 0.0
    %293 = vmatpush1.msra.mxu0 0.0
    %294 = vmatprep.subr.mxu0 0.0
    %295 = vmatpush1.msra.mxu0 0.0
    %296 = vmatprep.subr.mxu0 0.0
    %297 = vmatpush1.msra.mxu0 0.0
    %298 = vmatprep.subr.mxu0 0.0
    %299 = vmatpush1.msra.mxu0 0.0
    %300 = vmatprep.subr.mxu0 0.0
    %301 = vmatpush1.msra.mxu0 1.0
    %302 = vmatprep.subr.mxu0 0.0
    %303 = vmatpush1.msra.mxu0 1.0
    %304 = vmatprep.subr.mxu0 0.0
    %305 = vmatpush1.msra.mxu0 1.0
    %306 = vmatprep.subr.mxu0 0.0
    %307 = vmatpush1.msra.mxu0 1.0
    %308 = vmatprep.subr.mxu0 0.0
    %309 = vmatpush2.msra.mxu0 0.0
    %310 = vmatprep.subr.mxu0 0.0
    %311 = vmatpush2.msra.mxu0 0.0
    %312 = vmatprep.subr.mxu0 0.0
    %313 = vmatpush2.msra.mxu0 0.0
    %314 = vmatprep.subr.mxu0 0.0
    %315 = vmatpush2.msra.mxu0 0.0
    %316 = vmatprep.subr.mxu0 0.0
    %317 = vmatpush2.msra.mxu0 0.0
    %318 = vmatprep.subr.mxu0 0.0
    %319 = vmatpush2.msra.mxu0 0.0
    %320 = vmatprep.subr.mxu0 0.0
    %321 = vmatpush2.msra.mxu0 0.0
    %322 = vmatprep.subr.mxu0 0.0
    %323 = vmatpush2.msra.mxu0 0.0
    %324 = vmatprep.subr.mxu0 0.0
    %325 = vmatpush2.msra.mxu0 0.0
    %326 = vmatprep.subr.mxu0 0.0
    %327 = vmatpush2.msra.mxu0 0.0
    %328 = vmatprep.subr.mxu0 0.0
    %329 = vmatpush2.msra.mxu0 0.0
    %330 = vmatprep.subr.mxu0 0.0
    %331 = vmatpush2.msra.mxu0 0.0
    %332 = vmatprep.subr.mxu0 0.0
    %333 = vmatpush2.msra.mxu0 0.0
    %334 = vmatprep.subr.mxu0 0.0
    %335 = vmatpush2.msra.mxu0 0.0
    %336 = vmatprep.subr.mxu0 0.0
    %337 = vmatpush2.msra.mxu0 0.0
    %338 = vmatprep.subr.mxu0 0.0
    %339 = vmatpush2.msra.mxu0 0.0
    %340 = vmatprep.mubr.f32.mxu0 0.0
    %v341 = vand.u32 %v30, 4294901760
    %v342 = vsub.f32 %v30, %v341
    %v343 = vand.u32 %v342, 4294901760
    %344 = vmatmul.mubr.f32.gmra.mxu0 %v343
    %v345 = vpop.f32.mrf.mxu0
    %v346 = vadd.f32 %v266, %v345
    %v347 = vpop.f32.mrf.mxu0
    %348 = vmatprep.mubr.f32.mxu0 0.0
    %v349 = vand.u32 %v33, 4294901760
    %v350 = vsub.f32 %v33, %v349
    %v351 = vand.u32 %v350, 4294901760
    %352 = vmatmul.mubr.f32.gmra.mxu0 %v351
    %v353 = vpop.f32.mrf.mxu0
    %v354 = vadd.f32 %v273, %v353
    %v355 = vpop.f32.mrf.mxu0
    %356 = vdwg.mxu0
    %357 = vmatprep.subr.mxu0 0.0
    %358 = vmatpush1.msra.mxu0 0.0
    %359 = vmatprep.subr.mxu0 0.0
    %360 = vmatpush1.msra.mxu0 0.0
    %361 = vmatprep.subr.mxu0 0.0
    %362 = vmatpush1.msra.mxu0 0.0
    %363 = vmatprep.subr.mxu0 0.0
    %364 = vmatpush1.msra.mxu0 0.0
    %365 = vmatprep.subr.mxu0 0.0
    %366 = vmatpush1.msra.mxu0 0.0
    %367 = vmatprep.subr.mxu0 0.0
    %368 = vmatpush1.msra.mxu0 0.0
    %369 = vmatprep.subr.mxu0 0.0
    %370 = vmatpush1.msra.mxu0 0.0
    %371 = vmatprep.subr.mxu0 0.0
    %372 = vmatpush1.msra.mxu0 0.0
    %373 = vmatprep.subr.mxu0 0.0
    %374 = vmatpush1.msra.mxu0 0.0
    %375 = vmatprep.subr.mxu0 0.0
    %376 = vmatpush1.msra.mxu0 0.0
    %377 = vmatprep.subr.mxu0 0.0
    %378 = vmatpush1.msra.mxu0 0.0
    %379 = vmatprep.subr.mxu0 0.0
    %380 = vmatpush1.msra.mxu0 0.0
    %381 = vmatprep.subr.mxu0 0.0
    %382 = vmatpush1.msra.mxu0 0.0
    %383 = vmatprep.subr.mxu0 0.0
    %384 = vmatpush1.msra.mxu0 0.0
    %385 = vmatprep.subr.mxu0 0.0
    %386 = vmatpush1.msra.mxu0 0.0
    %387 = vmatprep.subr.mxu0 0.0
    %388 = vmatpush1.msra.mxu0 0.0
    %389 = vmatprep.subr.mxu0 0.0
    %390 = vmatpush2.msra.mxu0 0.0
    %391 = vmatprep.subr.mxu0 0.0
    %392 = vmatpush2.msra.mxu0 0.0
    %393 = vmatprep.subr.mxu0 0.0
    %394 = vmatpush2.msra.mxu0 0.0
    %395 = vmatprep.subr.mxu0 0.0
    %396 = vmatpush2.msra.mxu0 0.0
    %397 = vmatprep.subr.mxu0 0.0
    %398 = vmatpush2.msra.mxu0 0.0
    %399 = vmatprep.subr.mxu0 0.0
    %400 = vmatpush2.msra.mxu0 0.0
    %401 = vmatprep.subr.mxu0 0.0
    %402 = vmatpush2.msra.mxu0 0.0
    %403 = vmatprep.subr.mxu0 0.0
    %404 = vmatpush2.msra.mxu0 0.0
    %405 = vmatprep.subr.mxu0 0.0
    %406 = vmatpush2.msra.mxu0 0.0
    %407 = vmatprep.subr.mxu0 0.0
    %408 = vmatpush2.msra.mxu0 0.0
    %409 = vmatprep.subr.mxu0 0.0
    %410 = vmatpush2.msra.mxu0 0.0
    %411 = vmatprep.subr.mxu0 0.0
    %412 = vmatpush2.msra.mxu0 0.0
    %413 = vmatprep.subr.mxu0 0.0
    %414 = vmatpush2.msra.mxu0 0.0
    %415 = vmatprep.subr.mxu0 0.0
    %416 = vmatpush2.msra.mxu0 0.0
    %417 = vmatprep.subr.mxu0 0.0
    %418 = vmatpush2.msra.mxu0 0.0
    %419 = vmatprep.subr.mxu0 0.0
    %420 = vmatpush2.msra.mxu0 0.0
    %421 = vmatprep.mubr.f32.mxu0 0.0
    %v422 = vand.u32 %v30, 4294901760
    %423 = vmatmul.mubr.f32.gmra.mxu0 %v422
    %v424 = vpop.f32.mrf.mxu0
    %v425 = vadd.f32 %v346, %v424
    %v426 = vpop.f32.mrf.mxu0
    %427 = vmatprep.mubr.f32.mxu0 0.0
    %v428 = vand.u32 %v33, 4294901760
    %429 = vmatmul.mubr.f32.gmra.mxu0 %v428
    %v430 = vpop.f32.mrf.mxu0
    %v431 = vadd.f32 %v354, %v430
    %v432 = vpop.f32.mrf.mxu0
    %433 = vdwg.mxu0
    %434 = vmatprep.subr.mxu0 0.0
    %435 = vmatpush1.msra.mxu0 0.0
    %436 = vmatprep.subr.mxu0 0.0
    %437 = vmatpush1.msra.mxu0 0.0
    %438 = vmatprep.subr.mxu0 0.0
    %439 = vmatpush1.msra.mxu0 0.0
    %440 = vmatprep.subr.mxu0 0.0
    %441 = vmatpush1.msra.mxu0 0.0
    %442 = vmatprep.subr.mxu0 0.0
    %443 = vmatpush1.msra.mxu0 0.0
    %444 = vmatprep.subr.mxu0 0.0
    %445 = vmatpush1.msra.mxu0 0.0
    %446 = vmatprep.subr.mxu0 0.0
    %447 = vmatpush1.msra.mxu0 0.0
    %448 = vmatprep.subr.mxu0 0.0
    %449 = vmatpush1.msra.mxu0 0.0
    %450 = vmatprep.subr.mxu0 0.0
    %451 = vmatpush1.msra.mxu0 0.0
    %452 = vmatprep.subr.mxu0 0.0
    %453 = vmatpush1.msra.mxu0 0.0
    %454 = vmatprep.subr.mxu0 0.0
    %455 = vmatpush1.msra.mxu0 0.0
    %456 = vmatprep.subr.mxu0 0.0
    %457 = vmatpush1.msra.mxu0 0.0
    %458 = vmatprep.subr.mxu0 0.0
    %459 = vmatpush1.msra.mxu0 1.0
    %460 = vmatprep.subr.mxu0 0.0
    %461 = vmatpush1.msra.mxu0 1.0
    %462 = vmatprep.subr.mxu0 0.0
    %463 = vmatpush1.msra.mxu0 1.0
    %464 = vmatprep.subr.mxu0 0.0
    %465 = vmatpush1.msra.mxu0 1.0
    %466 = vmatprep.subr.mxu0 0.0
    %467 = vmatpush2.msra.mxu0 0.0
    %468 = vmatprep.subr.mxu0 0.0
    %469 = vmatpush2.msra.mxu0 0.0
    %470 = vmatprep.subr.mxu0 0.0
    %471 = vmatpush2.msra.mxu0 0.0
    %472 = vmatprep.subr.mxu0 0.0
    %473 = vmatpush2.msra.mxu0 0.0
    %474 = vmatprep.subr.mxu0 0.0
    %475 = vmatpush2.msra.mxu0 0.0
    %476 = vmatprep.subr.mxu0 0.0
    %477 = vmatpush2.msra.mxu0 0.0
    %478 = vmatprep.subr.mxu0 0.0
    %479 = vmatpush2.msra.mxu0 0.0
    %480 = vmatprep.subr.mxu0 0.0
    %481 = vmatpush2.msra.mxu0 0.0
    %482 = vmatprep.subr.mxu0 0.0
    %483 = vmatpush2.msra.mxu0 0.0
    %484 = vmatprep.subr.mxu0 0.0
    %485 = vmatpush2.msra.mxu0 0.0
    %486 = vmatprep.subr.mxu0 0.0
    %487 = vmatpush2.msra.mxu0 0.0
    %488 = vmatprep.subr.mxu0 0.0
    %489 = vmatpush2.msra.mxu0 0.0
    %490 = vmatprep.subr.mxu0 0.0
    %491 = vmatpush2.msra.mxu0 0.0
    %492 = vmatprep.subr.mxu0 0.0
    %493 = vmatpush2.msra.mxu0 0.0
    %494 = vmatprep.subr.mxu0 0.0
    %495 = vmatpush2.msra.mxu0 0.0
    %496 = vmatprep.subr.mxu0 0.0
    %497 = vmatpush2.msra.mxu0 0.0
    %498 = vmatprep.mubr.f32.mxu0 0.0
    %v499 = vand.u32 %v30, 4294901760
    %500 = vmatmul.mubr.f32.gmra.mxu0 %v499
    %v501 = vpop.f32.mrf.mxu0
    %v502 = vadd.f32 %v425, %v501
    %v503 = vpop.f32.mrf.mxu0
    %504 = vmatprep.mubr.f32.mxu0 0.0
    %v505 = vand.u32 %v33, 4294901760
    %506 = vmatmul.mubr.f32.gmra.mxu0 %v505
    %v507 = vpop.f32.mrf.mxu0
    %v508 = vadd.f32 %v431, %v507
    %v509 = vpop.f32.mrf.mxu0
    %510 = vdwg.mxu0
    %v511 = vlog2.pop %v502
    %v512 = vmul.f32 %v511, 0.6931472
    %v513 = vlog2.pop %v508
    %v514 = vmul.f32 %v513, 0.6931472
    %v515 = vadd.f32 %v19, %v512
    %v516 = vadd.f32 %v22, %v514
    %v517 = vlaneseq
    %v518 = vand.u32 %v517, 127
    %519 = vset.pattern.permute.xlu0 0
    %520 = vperm.xlu0 %519, %v14
    %v521 = vpop.permute.xlu0 %520
    %522 = vset.pattern.permute.xlu0 0
    %523 = vperm.xlu0 %522, %v15
    %v524 = vpop.permute.xlu0 %523
    %vm525 = vcmp.eq.s32.totalorder %v518, %v521
    %vm526 = vcmp.eq.s32.totalorder %v518, %v524
    %v527 = vsel %vm525, 0.903125, 0.003125
    %v528 = vsel %vm526, 0.903125, 0.003125
    %v529 = vmul.f32 %v527, %v12
    %v530 = vmul.f32 %v528, %v13
    %v532 = vsel %vm16, %v529, 0
    %v535 = vsel %vm16, %v530, 0
    %537 = vmatprep.subr.mxu0 0.0
    %538 = vmatpush1.msra.mxu0 0.0
    %539 = vmatprep.subr.mxu0 0.0
    %540 = vmatpush1.msra.mxu0 0.0
    %541 = vmatprep.subr.mxu0 0.0
    %542 = vmatpush1.msra.mxu0 0.0
    %543 = vmatprep.subr.mxu0 0.0
    %544 = vmatpush1.msra.mxu0 0.0
    %545 = vmatprep.subr.mxu0 0.0
    %546 = vmatpush1.msra.mxu0 0.0
    %547 = vmatprep.subr.mxu0 0.0
    %548 = vmatpush1.msra.mxu0 0.0
    %549 = vmatprep.subr.mxu0 0.0
    %550 = vmatpush1.msra.mxu0 0.0
    %551 = vmatprep.subr.mxu0 0.0
    %552 = vmatpush1.msra.mxu0 0.0
    %553 = vmatprep.subr.mxu0 0.0
    %554 = vmatpush1.msra.mxu0 0.0
    %555 = vmatprep.subr.mxu0 0.0
    %556 = vmatpush1.msra.mxu0 0.0
    %557 = vmatprep.subr.mxu0 0.0
    %558 = vmatpush1.msra.mxu0 0.0
    %559 = vmatprep.subr.mxu0 0.0
    %560 = vmatpush1.msra.mxu0 0.0
    %561 = vmatprep.subr.mxu0 0.0
    %562 = vmatpush1.msra.mxu0 1.0
    %563 = vmatprep.subr.mxu0 0.0
    %564 = vmatpush1.msra.mxu0 1.0
    %565 = vmatprep.subr.mxu0 0.0
    %566 = vmatpush1.msra.mxu0 1.0
    %567 = vmatprep.subr.mxu0 0.0
    %568 = vmatpush1.msra.mxu0 1.0
    %569 = vmatprep.subr.mxu0 0.0
    %570 = vmatpush2.msra.mxu0 0.0
    %571 = vmatprep.subr.mxu0 0.0
    %572 = vmatpush2.msra.mxu0 0.0
    %573 = vmatprep.subr.mxu0 0.0
    %574 = vmatpush2.msra.mxu0 0.0
    %575 = vmatprep.subr.mxu0 0.0
    %576 = vmatpush2.msra.mxu0 0.0
    %577 = vmatprep.subr.mxu0 0.0
    %578 = vmatpush2.msra.mxu0 0.0
    %579 = vmatprep.subr.mxu0 0.0
    %580 = vmatpush2.msra.mxu0 0.0
    %581 = vmatprep.subr.mxu0 0.0
    %582 = vmatpush2.msra.mxu0 0.0
    %583 = vmatprep.subr.mxu0 0.0
    %584 = vmatpush2.msra.mxu0 0.0
    %585 = vmatprep.subr.mxu0 0.0
    %586 = vmatpush2.msra.mxu0 0.0
    %587 = vmatprep.subr.mxu0 0.0
    %588 = vmatpush2.msra.mxu0 0.0
    %589 = vmatprep.subr.mxu0 0.0
    %590 = vmatpush2.msra.mxu0 0.0
    %591 = vmatprep.subr.mxu0 0.0
    %592 = vmatpush2.msra.mxu0 0.0
    %593 = vmatprep.subr.mxu0 0.0
    %594 = vmatpush2.msra.mxu0 0.0
    %595 = vmatprep.subr.mxu0 0.0
    %596 = vmatpush2.msra.mxu0 0.0
    %597 = vmatprep.subr.mxu0 0.0
    %598 = vmatpush2.msra.mxu0 0.0
    %599 = vmatprep.subr.mxu0 0.0
    %600 = vmatpush2.msra.mxu0 0.0
    %601 = vmatprep.mubr.f32.mxu0 0.0
    %v602 = vand.u32 %v532, 4294901760
    %v603 = vsub.f32 %v532, %v602
    %v604 = vand.u32 %v603, 4294901760
    %v605 = vsub.f32 %v603, %v604
    %v606 = vand.u32 %v605, 4294901760
    %607 = vmatmul.mubr.f32.gmra.mxu0 %v606
    %v608 = vpop.f32.mrf.mxu0
    %v609 = vadd.f32 0.0, %v608
    %v610 = vpop.f32.mrf.mxu0
    %611 = vmatprep.mubr.f32.mxu0 0.0
    %v612 = vand.u32 %v535, 4294901760
    %v613 = vsub.f32 %v535, %v612
    %v614 = vand.u32 %v613, 4294901760
    %v615 = vsub.f32 %v613, %v614
    %v616 = vand.u32 %v615, 4294901760
    %617 = vmatmul.mubr.f32.gmra.mxu0 %v616
    %v618 = vpop.f32.mrf.mxu0
    %v619 = vadd.f32 0.0, %v618
    %v620 = vpop.f32.mrf.mxu0
    %621 = vdwg.mxu0
    %622 = vmatprep.subr.mxu0 0.0
    %623 = vmatpush1.msra.mxu0 0.0
    %624 = vmatprep.subr.mxu0 0.0
    %625 = vmatpush1.msra.mxu0 0.0
    %626 = vmatprep.subr.mxu0 0.0
    %627 = vmatpush1.msra.mxu0 0.0
    %628 = vmatprep.subr.mxu0 0.0
    %629 = vmatpush1.msra.mxu0 0.0
    %630 = vmatprep.subr.mxu0 0.0
    %631 = vmatpush1.msra.mxu0 0.0
    %632 = vmatprep.subr.mxu0 0.0
    %633 = vmatpush1.msra.mxu0 0.0
    %634 = vmatprep.subr.mxu0 0.0
    %635 = vmatpush1.msra.mxu0 0.0
    %636 = vmatprep.subr.mxu0 0.0
    %637 = vmatpush1.msra.mxu0 0.0
    %638 = vmatprep.subr.mxu0 0.0
    %639 = vmatpush1.msra.mxu0 0.0
    %640 = vmatprep.subr.mxu0 0.0
    %641 = vmatpush1.msra.mxu0 0.0
    %642 = vmatprep.subr.mxu0 0.0
    %643 = vmatpush1.msra.mxu0 0.0
    %644 = vmatprep.subr.mxu0 0.0
    %645 = vmatpush1.msra.mxu0 0.0
    %646 = vmatprep.subr.mxu0 0.0
    %647 = vmatpush1.msra.mxu0 0.0
    %648 = vmatprep.subr.mxu0 0.0
    %649 = vmatpush1.msra.mxu0 0.0
    %650 = vmatprep.subr.mxu0 0.0
    %651 = vmatpush1.msra.mxu0 0.0
    %652 = vmatprep.subr.mxu0 0.0
    %653 = vmatpush1.msra.mxu0 0.0
    %654 = vmatprep.subr.mxu0 0.0
    %655 = vmatpush2.msra.mxu0 0.0
    %656 = vmatprep.subr.mxu0 0.0
    %657 = vmatpush2.msra.mxu0 0.0
    %658 = vmatprep.subr.mxu0 0.0
    %659 = vmatpush2.msra.mxu0 0.0
    %660 = vmatprep.subr.mxu0 0.0
    %661 = vmatpush2.msra.mxu0 0.0
    %662 = vmatprep.subr.mxu0 0.0
    %663 = vmatpush2.msra.mxu0 0.0
    %664 = vmatprep.subr.mxu0 0.0
    %665 = vmatpush2.msra.mxu0 0.0
    %666 = vmatprep.subr.mxu0 0.0
    %667 = vmatpush2.msra.mxu0 0.0
    %668 = vmatprep.subr.mxu0 0.0
    %669 = vmatpush2.msra.mxu0 0.0
    %670 = vmatprep.subr.mxu0 0.0
    %671 = vmatpush2.msra.mxu0 0.0
    %672 = vmatprep.subr.mxu0 0.0
    %673 = vmatpush2.msra.mxu0 0.0
    %674 = vmatprep.subr.mxu0 0.0
    %675 = vmatpush2.msra.mxu0 0.0
    %676 = vmatprep.subr.mxu0 0.0
    %677 = vmatpush2.msra.mxu0 0.0
    %678 = vmatprep.subr.mxu0 0.0
    %679 = vmatpush2.msra.mxu0 0.0
    %680 = vmatprep.subr.mxu0 0.0
    %681 = vmatpush2.msra.mxu0 0.0
    %682 = vmatprep.subr.mxu0 0.0
    %683 = vmatpush2.msra.mxu0 0.0
    %684 = vmatprep.subr.mxu0 0.0
    %685 = vmatpush2.msra.mxu0 0.0
    %686 = vmatprep.mubr.f32.mxu0 0.0
    %v687 = vand.u32 %v532, 4294901760
    %688 = vmatmul.mubr.f32.gmra.mxu0 %v687
    %v689 = vpop.f32.mrf.mxu0
    %v690 = vadd.f32 %v609, %v689
    %v691 = vpop.f32.mrf.mxu0
    %692 = vmatprep.mubr.f32.mxu0 0.0
    %v693 = vand.u32 %v535, 4294901760
    %694 = vmatmul.mubr.f32.gmra.mxu0 %v693
    %v695 = vpop.f32.mrf.mxu0
    %v696 = vadd.f32 %v619, %v695
    %v697 = vpop.f32.mrf.mxu0
    %698 = vdwg.mxu0
    %699 = vmatprep.subr.mxu0 0.0
    %700 = vmatpush1.msra.mxu0 0.0
    %701 = vmatprep.subr.mxu0 0.0
    %702 = vmatpush1.msra.mxu0 0.0
    %703 = vmatprep.subr.mxu0 0.0
    %704 = vmatpush1.msra.mxu0 0.0
    %705 = vmatprep.subr.mxu0 0.0
    %706 = vmatpush1.msra.mxu0 0.0
    %707 = vmatprep.subr.mxu0 0.0
    %708 = vmatpush1.msra.mxu0 0.0
    %709 = vmatprep.subr.mxu0 0.0
    %710 = vmatpush1.msra.mxu0 0.0
    %711 = vmatprep.subr.mxu0 0.0
    %712 = vmatpush1.msra.mxu0 0.0
    %713 = vmatprep.subr.mxu0 0.0
    %714 = vmatpush1.msra.mxu0 0.0
    %715 = vmatprep.subr.mxu0 0.0
    %716 = vmatpush1.msra.mxu0 0.0
    %717 = vmatprep.subr.mxu0 0.0
    %718 = vmatpush1.msra.mxu0 0.0
    %719 = vmatprep.subr.mxu0 0.0
    %720 = vmatpush1.msra.mxu0 0.0
    %721 = vmatprep.subr.mxu0 0.0
    %722 = vmatpush1.msra.mxu0 0.0
    %723 = vmatprep.subr.mxu0 0.0
    %724 = vmatpush1.msra.mxu0 0.0
    %725 = vmatprep.subr.mxu0 0.0
    %726 = vmatpush1.msra.mxu0 0.0
    %727 = vmatprep.subr.mxu0 0.0
    %728 = vmatpush1.msra.mxu0 0.0
    %729 = vmatprep.subr.mxu0 0.0
    %730 = vmatpush1.msra.mxu0 0.0
    %731 = vmatprep.subr.mxu0 0.0
    %732 = vmatpush2.msra.mxu0 0.0
    %733 = vmatprep.subr.mxu0 0.0
    %734 = vmatpush2.msra.mxu0 0.0
    %735 = vmatprep.subr.mxu0 0.0
    %736 = vmatpush2.msra.mxu0 0.0
    %737 = vmatprep.subr.mxu0 0.0
    %738 = vmatpush2.msra.mxu0 0.0
    %739 = vmatprep.subr.mxu0 0.0
    %740 = vmatpush2.msra.mxu0 0.0
    %741 = vmatprep.subr.mxu0 0.0
    %742 = vmatpush2.msra.mxu0 0.0
    %743 = vmatprep.subr.mxu0 0.0
    %744 = vmatpush2.msra.mxu0 0.0
    %745 = vmatprep.subr.mxu0 0.0
    %746 = vmatpush2.msra.mxu0 0.0
    %747 = vmatprep.subr.mxu0 0.0
    %748 = vmatpush2.msra.mxu0 0.0
    %749 = vmatprep.subr.mxu0 0.0
    %750 = vmatpush2.msra.mxu0 0.0
    %751 = vmatprep.subr.mxu0 0.0
    %752 = vmatpush2.msra.mxu0 0.0
    %753 = vmatprep.subr.mxu0 0.0
    %754 = vmatpush2.msra.mxu0 0.0
    %755 = vmatprep.subr.mxu0 0.0
    %756 = vmatpush2.msra.mxu0 0.0
    %757 = vmatprep.subr.mxu0 0.0
    %758 = vmatpush2.msra.mxu0 0.0
    %759 = vmatprep.subr.mxu0 0.0
    %760 = vmatpush2.msra.mxu0 0.0
    %761 = vmatprep.subr.mxu0 0.0
    %762 = vmatpush2.msra.mxu0 0.0
    %763 = vmatprep.mubr.f32.mxu0 0.0
    %v764 = vand.u32 %v532, 4294901760
    %v765 = vsub.f32 %v532, %v764
    %766 = vmatmul.mubr.f32.gmra.mxu0 %v765
    %v767 = vpop.f32.mrf.mxu0
    %v768 = vadd.f32 %v690, %v767
    %v769 = vpop.f32.mrf.mxu0
    %770 = vmatprep.mubr.f32.mxu0 0.0
    %v771 = vand.u32 %v535, 4294901760
    %v772 = vsub.f32 %v535, %v771
    %773 = vmatmul.mubr.f32.gmra.mxu0 %v772
    %v774 = vpop.f32.mrf.mxu0
    %v775 = vadd.f32 %v696, %v774
    %v776 = vpop.f32.mrf.mxu0
    %777 = vdwg.mxu0
    %778 = vmatprep.subr.mxu0 0.0
    %779 = vmatpush1.msra.mxu0 0.0
    %780 = vmatprep.subr.mxu0 0.0
    %781 = vmatpush1.msra.mxu0 0.0
    %782 = vmatprep.subr.mxu0 0.0
    %783 = vmatpush1.msra.mxu0 0.0
    %784 = vmatprep.subr.mxu0 0.0
    %785 = vmatpush1.msra.mxu0 0.0
    %786 = vmatprep.subr.mxu0 0.0
    %787 = vmatpush1.msra.mxu0 0.0
    %788 = vmatprep.subr.mxu0 0.0
    %789 = vmatpush1.msra.mxu0 0.0
    %790 = vmatprep.subr.mxu0 0.0
    %791 = vmatpush1.msra.mxu0 0.0
    %792 = vmatprep.subr.mxu0 0.0
    %793 = vmatpush1.msra.mxu0 0.0
    %794 = vmatprep.subr.mxu0 0.0
    %795 = vmatpush1.msra.mxu0 0.0
    %796 = vmatprep.subr.mxu0 0.0
    %797 = vmatpush1.msra.mxu0 0.0
    %798 = vmatprep.subr.mxu0 0.0
    %799 = vmatpush1.msra.mxu0 0.0
    %800 = vmatprep.subr.mxu0 0.0
    %801 = vmatpush1.msra.mxu0 0.0
    %802 = vmatprep.subr.mxu0 0.0
    %803 = vmatpush1.msra.mxu0 1.0
    %804 = vmatprep.subr.mxu0 0.0
    %805 = vmatpush1.msra.mxu0 1.0
    %806 = vmatprep.subr.mxu0 0.0
    %807 = vmatpush1.msra.mxu0 1.0
    %808 = vmatprep.subr.mxu0 0.0
    %809 = vmatpush1.msra.mxu0 1.0
    %810 = vmatprep.subr.mxu0 0.0
    %811 = vmatpush2.msra.mxu0 0.0
    %812 = vmatprep.subr.mxu0 0.0
    %813 = vmatpush2.msra.mxu0 0.0
    %814 = vmatprep.subr.mxu0 0.0
    %815 = vmatpush2.msra.mxu0 0.0
    %816 = vmatprep.subr.mxu0 0.0
    %817 = vmatpush2.msra.mxu0 0.0
    %818 = vmatprep.subr.mxu0 0.0
    %819 = vmatpush2.msra.mxu0 0.0
    %820 = vmatprep.subr.mxu0 0.0
    %821 = vmatpush2.msra.mxu0 0.0
    %822 = vmatprep.subr.mxu0 0.0
    %823 = vmatpush2.msra.mxu0 0.0
    %824 = vmatprep.subr.mxu0 0.0
    %825 = vmatpush2.msra.mxu0 0.0
    %826 = vmatprep.subr.mxu0 0.0
    %827 = vmatpush2.msra.mxu0 0.0
    %828 = vmatprep.subr.mxu0 0.0
    %829 = vmatpush2.msra.mxu0 0.0
    %830 = vmatprep.subr.mxu0 0.0
    %831 = vmatpush2.msra.mxu0 0.0
    %832 = vmatprep.subr.mxu0 0.0
    %833 = vmatpush2.msra.mxu0 0.0
    %834 = vmatprep.subr.mxu0 0.0
    %835 = vmatpush2.msra.mxu0 0.0
    %836 = vmatprep.subr.mxu0 0.0
    %837 = vmatpush2.msra.mxu0 0.0
    %838 = vmatprep.subr.mxu0 0.0
    %839 = vmatpush2.msra.mxu0 0.0
    %840 = vmatprep.subr.mxu0 0.0
    %841 = vmatpush2.msra.mxu0 0.0
    %842 = vmatprep.mubr.f32.mxu0 0.0
    %v843 = vand.u32 %v532, 4294901760
    %v844 = vsub.f32 %v532, %v843
    %v845 = vand.u32 %v844, 4294901760
    %846 = vmatmul.mubr.f32.gmra.mxu0 %v845
    %v847 = vpop.f32.mrf.mxu0
    %v848 = vadd.f32 %v768, %v847
    %v849 = vpop.f32.mrf.mxu0
    %850 = vmatprep.mubr.f32.mxu0 0.0
    %v851 = vand.u32 %v535, 4294901760
    %v852 = vsub.f32 %v535, %v851
    %v853 = vand.u32 %v852, 4294901760
    %854 = vmatmul.mubr.f32.gmra.mxu0 %v853
    %v855 = vpop.f32.mrf.mxu0
    %v856 = vadd.f32 %v775, %v855
    %v857 = vpop.f32.mrf.mxu0
    %858 = vdwg.mxu0
    %859 = vmatprep.subr.mxu0 0.0
    %860 = vmatpush1.msra.mxu0 0.0
    %861 = vmatprep.subr.mxu0 0.0
    %862 = vmatpush1.msra.mxu0 0.0
    %863 = vmatprep.subr.mxu0 0.0
    %864 = vmatpush1.msra.mxu0 0.0
    %865 = vmatprep.subr.mxu0 0.0
    %866 = vmatpush1.msra.mxu0 0.0
    %867 = vmatprep.subr.mxu0 0.0
    %868 = vmatpush1.msra.mxu0 0.0
    %869 = vmatprep.subr.mxu0 0.0
    %870 = vmatpush1.msra.mxu0 0.0
    %871 = vmatprep.subr.mxu0 0.0
    %872 = vmatpush1.msra.mxu0 0.0
    %873 = vmatprep.subr.mxu0 0.0
    %874 = vmatpush1.msra.mxu0 0.0
    %875 = vmatprep.subr.mxu0 0.0
    %876 = vmatpush1.msra.mxu0 0.0
    %877 = vmatprep.subr.mxu0 0.0
    %878 = vmatpush1.msra.mxu0 0.0
    %879 = vmatprep.subr.mxu0 0.0
    %880 = vmatpush1.msra.mxu0 0.0
    %881 = vmatprep.subr.mxu0 0.0
    %882 = vmatpush1.msra.mxu0 0.0
    %883 = vmatprep.subr.mxu0 0.0
    %884 = vmatpush1.msra.mxu0 0.0
    %885 = vmatprep.subr.mxu0 0.0
    %886 = vmatpush1.msra.mxu0 0.0
    %887 = vmatprep.subr.mxu0 0.0
    %888 = vmatpush1.msra.mxu0 0.0
    %889 = vmatprep.subr.mxu0 0.0
    %890 = vmatpush1.msra.mxu0 0.0
    %891 = vmatprep.subr.mxu0 0.0
    %892 = vmatpush2.msra.mxu0 0.0
    %893 = vmatprep.subr.mxu0 0.0
    %894 = vmatpush2.msra.mxu0 0.0
    %895 = vmatprep.subr.mxu0 0.0
    %896 = vmatpush2.msra.mxu0 0.0
    %897 = vmatprep.subr.mxu0 0.0
    %898 = vmatpush2.msra.mxu0 0.0
    %899 = vmatprep.subr.mxu0 0.0
    %900 = vmatpush2.msra.mxu0 0.0
    %901 = vmatprep.subr.mxu0 0.0
    %902 = vmatpush2.msra.mxu0 0.0
    %903 = vmatprep.subr.mxu0 0.0
    %904 = vmatpush2.msra.mxu0 0.0
    %905 = vmatprep.subr.mxu0 0.0
    %906 = vmatpush2.msra.mxu0 0.0
    %907 = vmatprep.subr.mxu0 0.0
    %908 = vmatpush2.msra.mxu0 0.0
    %909 = vmatprep.subr.mxu0 0.0
    %910 = vmatpush2.msra.mxu0 0.0
    %911 = vmatprep.subr.mxu0 0.0
    %912 = vmatpush2.msra.mxu0 0.0
    %913 = vmatprep.subr.mxu0 0.0
    %914 = vmatpush2.msra.mxu0 0.0
    %915 = vmatprep.subr.mxu0 0.0
    %916 = vmatpush2.msra.mxu0 0.0
    %917 = vmatprep.subr.mxu0 0.0
    %918 = vmatpush2.msra.mxu0 0.0
    %919 = vmatprep.subr.mxu0 0.0
    %920 = vmatpush2.msra.mxu0 0.0
    %921 = vmatprep.subr.mxu0 0.0
    %922 = vmatpush2.msra.mxu0 0.0
    %923 = vmatprep.mubr.f32.mxu0 0.0
    %v924 = vand.u32 %v532, 4294901760
    %925 = vmatmul.mubr.f32.gmra.mxu0 %v924
    %v926 = vpop.f32.mrf.mxu0
    %v927 = vadd.f32 %v848, %v926
    %v928 = vpop.f32.mrf.mxu0
    %929 = vmatprep.mubr.f32.mxu0 0.0
    %v930 = vand.u32 %v535, 4294901760
    %931 = vmatmul.mubr.f32.gmra.mxu0 %v930
    %v932 = vpop.f32.mrf.mxu0
    %v933 = vadd.f32 %v856, %v932
    %v934 = vpop.f32.mrf.mxu0
    %935 = vdwg.mxu0
    %936 = vmatprep.subr.mxu0 0.0
    %937 = vmatpush1.msra.mxu0 0.0
    %938 = vmatprep.subr.mxu0 0.0
    %939 = vmatpush1.msra.mxu0 0.0
    %940 = vmatprep.subr.mxu0 0.0
    %941 = vmatpush1.msra.mxu0 0.0
    %942 = vmatprep.subr.mxu0 0.0
    %943 = vmatpush1.msra.mxu0 0.0
    %944 = vmatprep.subr.mxu0 0.0
    %945 = vmatpush1.msra.mxu0 0.0
    %946 = vmatprep.subr.mxu0 0.0
    %947 = vmatpush1.msra.mxu0 0.0
    %948 = vmatprep.subr.mxu0 0.0
    %949 = vmatpush1.msra.mxu0 0.0
    %950 = vmatprep.subr.mxu0 0.0
    %951 = vmatpush1.msra.mxu0 0.0
    %952 = vmatprep.subr.mxu0 0.0
    %953 = vmatpush1.msra.mxu0 0.0
    %954 = vmatprep.subr.mxu0 0.0
    %955 = vmatpush1.msra.mxu0 0.0
    %956 = vmatprep.subr.mxu0 0.0
    %957 = vmatpush1.msra.mxu0 0.0
    %958 = vmatprep.subr.mxu0 0.0
    %959 = vmatpush1.msra.mxu0 0.0
    %960 = vmatprep.subr.mxu0 0.0
    %961 = vmatpush1.msra.mxu0 1.0
    %962 = vmatprep.subr.mxu0 0.0
    %963 = vmatpush1.msra.mxu0 1.0
    %964 = vmatprep.subr.mxu0 0.0
    %965 = vmatpush1.msra.mxu0 1.0
    %966 = vmatprep.subr.mxu0 0.0
    %967 = vmatpush1.msra.mxu0 1.0
    %968 = vmatprep.subr.mxu0 0.0
    %969 = vmatpush2.msra.mxu0 0.0
    %970 = vmatprep.subr.mxu0 0.0
    %971 = vmatpush2.msra.mxu0 0.0
    %972 = vmatprep.subr.mxu0 0.0
    %973 = vmatpush2.msra.mxu0 0.0
    %974 = vmatprep.subr.mxu0 0.0
    %975 = vmatpush2.msra.mxu0 0.0
    %976 = vmatprep.subr.mxu0 0.0
    %977 = vmatpush2.msra.mxu0 0.0
    %978 = vmatprep.subr.mxu0 0.0
    %979 = vmatpush2.msra.mxu0 0.0
    %980 = vmatprep.subr.mxu0 0.0
    %981 = vmatpush2.msra.mxu0 0.0
    %982 = vmatprep.subr.mxu0 0.0
    %983 = vmatpush2.msra.mxu0 0.0
    %984 = vmatprep.subr.mxu0 0.0
    %985 = vmatpush2.msra.mxu0 0.0
    %986 = vmatprep.subr.mxu0 0.0
    %987 = vmatpush2.msra.mxu0 0.0
    %988 = vmatprep.subr.mxu0 0.0
    %989 = vmatpush2.msra.mxu0 0.0
    %990 = vmatprep.subr.mxu0 0.0
    %991 = vmatpush2.msra.mxu0 0.0
    %992 = vmatprep.subr.mxu0 0.0
    %993 = vmatpush2.msra.mxu0 0.0
    %994 = vmatprep.subr.mxu0 0.0
    %995 = vmatpush2.msra.mxu0 0.0
    %996 = vmatprep.subr.mxu0 0.0
    %997 = vmatpush2.msra.mxu0 0.0
    %998 = vmatprep.subr.mxu0 0.0
    %999 = vmatpush2.msra.mxu0 0.0
    %1000 = vmatprep.mubr.f32.mxu0 0.0
    %v1001 = vand.u32 %v532, 4294901760
    %1002 = vmatmul.mubr.f32.gmra.mxu0 %v1001
    %v1003 = vpop.f32.mrf.mxu0
    %v1004 = vadd.f32 %v927, %v1003
    %v1005 = vpop.f32.mrf.mxu0
    %1006 = vmatprep.mubr.f32.mxu0 0.0
    %v1007 = vand.u32 %v535, 4294901760
    %1008 = vmatmul.mubr.f32.gmra.mxu0 %v1007
    %v1009 = vpop.f32.mrf.mxu0
    %v1010 = vadd.f32 %v933, %v1009
    %v1011 = vpop.f32.mrf.mxu0
    %1012 = vdwg.mxu0
    %v1013 = vsub.f32 %v515, %v1004
    %v1014 = vsub.f32 %v516, %v1010
    %s1015 = smul.u32 0, 16
    %v1016 = vlaneseq
    %v1017 = vshrl.u32 %v1016, 7
    %v1018 = vadd.s32 %v1017, 8
    %v1019 = vstv %s1015
    %v1020 = vadd.s32 %v1019, %v1017
    %v1021 = vadd.s32 %v1019, %v1018
    %vm1022 = vcmp.lt.s32.totalorder %v1020, 16
    %vm1023 = vcmp.lt.s32.totalorder %v1021, 16
    %v1024 = vsel %vm1022, %v1013, 0.0
    %v1025 = vsel %vm1023, %v1014, 0.0
    %vm1026 = vcmask 7168
    %v1027 = vsel %vm1026, %v1024, 0.0
    %v1028 = vsel %vm1026, %v1025, 0.0
    %v1029 = vadd.f32 %v1027, %v1028
    %1030 = vadd.xlane.f32.xlu0 %v1029
    %v1031 = vpop.xlane.xlu0 %1030
    %v1032 = vrot.slane %v1031, 4
    %v1033 = vadd.f32 %v1031, %v1032
    %v1034 = vrot.slane %v1033, 2
    %v1035 = vadd.f32 %v1033, %v1034
    %v1036 = vrot.slane %v1035, 1
    %v1037 = vadd.f32 %v1035, %v1036
    %s1038 = vtos %v1037
    %v1039 = vstv %s1038
    %1040 = vst [vmem:[#allocation2] sm:$0xff] %v1039
    // Predicated region
    $region10: #{tpu_custom_call.1} parent=1 // pred_check
      _
    $region11: #{tpu_custom_call.1} parent=1 // pred_check_branch
      %1042 = sbr.rel (0) target = $region13
    $region12: #{tpu_custom_call.1} parent=1 // pred_region
      %s1044 = ssub.s32 128, 128
      %1045 = vsyncadd [#allocation3], %s1044
      %s1047 = sshll.u32 [#allocation2], 4
      %s1048 = int_to_ptr.vmem [resolvable:$true] %s1047
      %1050 = dma.vmem_to_hbm [thread:$0]  %s1048, 128, %s2, [#allocation3]
    $region13: #{tpu_custom_call.1} parent=1 // pred_fallthru
      _
    // Predicated region
    $region14: #{tpu_custom_call.1} parent=1 // pred_check
      _
    $region15: #{tpu_custom_call.1} parent=1 // pred_check_branch
      %1052 = sbr.rel (0) target = $region17
    $region16: #{tpu_custom_call.1} parent=1 // pred_region
      %1053 = dma.done [#allocation3], 128
    $region17: #{tpu_custom_call.1} parent=1 // pred_fallthru
      _
    %1054 = vsyncpa [#allocation3], 1

</llo_original>
